<compile_context>
chip_gen: v7x
topology: tpu7x:2x2x1
jax: 0.10.0
libtpu: 0.0.40
codegen_flags: <defaults>
</compile_context>

<pallas_src>
import jax
import jax.numpy as jnp
from jax.experimental import pallas as pl
from jax.experimental.pallas import tpu as pltpu


def _round_up(x, m):
    return ((x + m - 1) // m) * m


def _dqn_critic_kernel(
    x_ref,    # [TB, Din]  concat(obs, act) tile, streamed per grid step
    w1_ref,   # [Din, H1]  resident
    b1_ref,   # [1, H1]    resident
    w2_ref,   # [H1, H2]   resident
    b2_ref,   # [1, H2]    resident
    w3_ref,   # [1, H2]    resident (output-head weight as a row)
    b3_ref,   # [1, 1]     resident
    q_ref,    # [TB, 1]    output tile
):
    x = x_ref[...]

    # Layer 1: single MXU pass over the merged (obs ++ act) contraction dim.
    h1 = jnp.dot(x, w1_ref[...], preferred_element_type=jnp.float32) + b1_ref[...]
    h1 = jnp.maximum(h1, 0.0)

    # Layer 2.
    h2 = jnp.dot(h1, w2_ref[...], preferred_element_type=jnp.float32) + b2_ref[...]
    h2 = jnp.maximum(h2, 0.0)

    # Output head (N=1): VPU multiply + lane reduction instead of an MXU pass.
    q = jnp.sum(h2 * w3_ref[...], axis=-1, keepdims=True) + b3_ref[...]
    q_ref[...] = q.astype(q_ref.dtype)


def dqn_critic_forward(obs, act, params, *, block_batch=512):
    """obs: [B, Do], act: [B, Da], params: dict of MLP weights. Returns [B, 1]."""
    B = obs.shape[0]

    # Merge the two layer-1 dots: concat once in the wrapper (exact, no accuracy
    # change) so the kernel does a single K = Do + Da contraction.
    x = jnp.concatenate([obs, act], axis=-1).astype(jnp.float32)   # [B, Din]
    Din = x.shape[1]
    H1 = params["w1"].shape[1]
    H2 = params["w2"].shape[1]

    # Batch tile: multiple of 8 sublanes; pad batch so every block is full.
    TB = min(block_batch, _round_up(B, 8))
    TB = _round_up(TB, 8)
    Bp = _round_up(B, TB)
    if Bp != B:
        x = jnp.pad(x, ((0, Bp - B), (0, 0)))

    grid = (Bp // TB,)

    kernel = pl.pallas_call(
        _dqn_critic_kernel,
        out_shape=jax.ShapeDtypeStruct((Bp, 1), jnp.float32),
        grid=grid,
        in_specs=[
            # Streamed per batch tile.
            pl.BlockSpec((TB, Din), lambda i: (i, 0)),
            # Weights/biases: constant block index -> fetched once, VMEM-resident.
            pl.BlockSpec((Din, H1), lambda i: (0, 0)),
            pl.BlockSpec((1, H1), lambda i: (0, 0)),
            pl.BlockSpec((H1, H2), lambda i: (0, 0)),
            pl.BlockSpec((1, H2), lambda i: (0, 0)),
            pl.BlockSpec((1, H2), lambda i: (0, 0)),
            pl.BlockSpec((1, 1), lambda i: (0, 0)),
        ],
        out_specs=pl.BlockSpec((TB, 1), lambda i: (i, 0)),
        compiler_params=pltpu.CompilerParams(
            dimension_semantics=("parallel",),
        ),
    )
    q = kernel(
        x,
        params["w1"],
        params["b1"],
        params["w2"],
        params["b2"],
        params["w3_row"],
        params["b3"],
    )
    return q[:B]


def init_params(key, obs_dim, act_dim, hidden_dim):
    """Deterministic synthetic init for MLP(obs_dim + act_dim, hidden_dim, 1)."""
    h1, h2 = hidden_dim
    in_dim = obs_dim + act_dim
    k1, k2, k3, kb1, kb2, kb3 = jax.random.split(key, 6)

    def lin(k, fan_in, fan_out):
        scale = 1.0 / jnp.sqrt(jnp.float32(fan_in))
        return jax.random.uniform(
            k, (fan_in, fan_out), jnp.float32, minval=-scale, maxval=scale
        )

    def bias(k, fan_in, fan_out):
        scale = 1.0 / jnp.sqrt(jnp.float32(fan_in))
        return jax.random.uniform(
            k, (1, fan_out), jnp.float32, minval=-scale, maxval=scale
        )

    return {
        "w1": lin(k1, in_dim, h1),            # [Din, H1]  (full merged W1)
        "b1": bias(kb1, in_dim, h1),          # [1, H1]
        "w2": lin(k2, h1, h2),                # [H1, H2]
        "b2": bias(kb2, h1, h2),              # [1, H2]
        "w3_row": lin(k3, h2, 1).T,           # [1, H2]  (output head as a row)
        "b3": bias(kb3, h2, 1),               # [1, 1]
    }


def reference_forward(obs, act, params):
    """Pure-JAX reference of the PyTorch semantics (concat -> MLP)."""
    x = jnp.concatenate([obs, act], axis=-1)
    h1 = jax.nn.relu(x @ params["w1"] + params["b1"])
    h2 = jax.nn.relu(h1 @ params["w2"] + params["b2"])
    return h2 @ params["w3_row"].T + params["b3"]


if __name__ == "__main__":
    # Small shapes consistent with the module: already-flattened obs/act vectors.
    # B=256 with block_batch=128 exercises the batch grid (grid=(2,)) and the
    # pipelined / weight-resident path while staying small.
    B, OBS_DIM, ACT_DIM = 256, 16, 8
    HIDDEN = [32, 32]

    key = jax.random.PRNGKey(0)
    k_obs, k_act, k_par = jax.random.split(key, 3)
    obs = jax.random.normal(k_obs, (B, OBS_DIM), jnp.float32)
    act = jax.random.normal(k_act, (B, ACT_DIM), jnp.float32)
    params = init_params(k_par, OBS_DIM, ACT_DIM, HIDDEN)

    qval = dqn_critic_forward(obs, act, params, block_batch=128)
    qval = jax.block_until_ready(qval)

    ref = reference_forward(obs, act, params)
    assert qval.shape == (B, 1)
    assert jnp.allclose(qval, ref, atol=1e-5, rtol=1e-5)

    print("KERNEL_OK")
</pallas_src>

<mosaic_0001>
module attributes {stable_mosaic.version = 11 : i64} {
  func.func @_dqn_critic_kernel(%arg0: i32, %arg1: memref<128x24xf32, #tpu.memory_space<vmem>>, %arg2: memref<24x32xf32, #tpu.memory_space<vmem>>, %arg3: memref<1x32xf32, #tpu.memory_space<vmem>>, %arg4: memref<32x32xf32, #tpu.memory_space<vmem>>, %arg5: memref<1x32xf32, #tpu.memory_space<vmem>>, %arg6: memref<1x32xf32, #tpu.memory_space<vmem>>, %arg7: memref<1x1xf32, #tpu.memory_space<vmem>>, %arg8: memref<128x1xf32, #tpu.memory_space<vmem>>) attributes {dimension_semantics = [#tpu.dimension_semantics<parallel>], iteration_bounds = array<i64: 2>, scalar_prefetch = 0 : i64, scratch_operands = 0 : i64, tpu.core_type = #tpu.core_type<tc>, window_params = [{transform_indices = @transform_0, window_bounds = array<i64: 128, 24>}, {pipeline_mode = #tpu.pipeline_mode<synchronous>, transform_indices = @transform_1, window_bounds = array<i64: 24, 32>}, {pipeline_mode = #tpu.pipeline_mode<synchronous>, transform_indices = @transform_2, window_bounds = array<i64: 1, 32>}, {pipeline_mode = #tpu.pipeline_mode<synchronous>, transform_indices = @transform_3, window_bounds = array<i64: 32, 32>}, {pipeline_mode = #tpu.pipeline_mode<synchronous>, transform_indices = @transform_4, window_bounds = array<i64: 1, 32>}, {pipeline_mode = #tpu.pipeline_mode<synchronous>, transform_indices = @transform_5, window_bounds = array<i64: 1, 32>}, {pipeline_mode = #tpu.pipeline_mode<synchronous>, transform_indices = @transform_6, window_bounds = array<i64: 1, 1>}, {transform_indices = @transform_7, window_bounds = array<i64: 128, 1>}]} {
    %c0 = arith.constant 0 : index
    %c0_0 = arith.constant 0 : index
    %0 = vector.load %arg1[%c0, %c0_0] : memref<128x24xf32, #tpu.memory_space<vmem>>, vector<128x24xf32>
    %c0_1 = arith.constant 0 : index
    %c0_2 = arith.constant 0 : index
    %1 = vector.load %arg2[%c0_1, %c0_2] : memref<24x32xf32, #tpu.memory_space<vmem>>, vector<24x32xf32>
    %cst = arith.constant dense<0.000000e+00> : vector<128x32xf32>
    %2 = tpu.matmul %0, %1, %cst {dimension_numbers = #tpu.dot_dimension_numbers<[1], [0], [0], [1], [0, 0, 1, 1], [], []>} : vector<128x24xf32>, vector<24x32xf32>, vector<128x32xf32> -> vector<128x32xf32>
    %c0_3 = arith.constant 0 : index
    %c0_4 = arith.constant 0 : index
    %3 = vector.load %arg3[%c0_3, %c0_4] : memref<1x32xf32, #tpu.memory_space<vmem>>, vector<1x32xf32>
    %4 = vector.broadcast %3 : vector<1x32xf32> to vector<128x32xf32>
    %5 = arith.addf %2, %4 : vector<128x32xf32>
    %cst_5 = arith.constant 0.000000e+00 : f32
    %6 = vector.broadcast %cst_5 : f32 to vector<128x32xf32>
    %7 = arith.maximumf %5, %6 : vector<128x32xf32>
    %c0_6 = arith.constant 0 : index
    %c0_7 = arith.constant 0 : index
    %8 = vector.load %arg4[%c0_6, %c0_7] : memref<32x32xf32, #tpu.memory_space<vmem>>, vector<32x32xf32>
    %cst_8 = arith.constant dense<0.000000e+00> : vector<128x32xf32>
    %9 = tpu.matmul %7, %8, %cst_8 {dimension_numbers = #tpu.dot_dimension_numbers<[1], [0], [0], [1], [0, 0, 1, 1], [], []>} : vector<128x32xf32>, vector<32x32xf32>, vector<128x32xf32> -> vector<128x32xf32>
    %c0_9 = arith.constant 0 : index
    %c0_10 = arith.constant 0 : index
    %10 = vector.load %arg5[%c0_9, %c0_10] : memref<1x32xf32, #tpu.memory_space<vmem>>, vector<1x32xf32>
    %11 = vector.broadcast %10 : vector<1x32xf32> to vector<128x32xf32>
    %12 = arith.addf %9, %11 : vector<128x32xf32>
    %cst_11 = arith.constant 0.000000e+00 : f32
    %13 = vector.broadcast %cst_11 : f32 to vector<128x32xf32>
    %14 = arith.maximumf %12, %13 : vector<128x32xf32>
    %c0_12 = arith.constant 0 : index
    %c0_13 = arith.constant 0 : index
    %15 = vector.load %arg6[%c0_12, %c0_13] : memref<1x32xf32, #tpu.memory_space<vmem>>, vector<1x32xf32>
    %16 = vector.broadcast %15 : vector<1x32xf32> to vector<128x32xf32>
    %17 = arith.mulf %14, %16 : vector<128x32xf32>
    %cst_14 = arith.constant dense<0.000000e+00> : vector<128xf32>
    %18 = vector.multi_reduction <add>, %17, %cst_14 [1] : vector<128x32xf32> to vector<128xf32>
    %19 = vector.shape_cast %18 : vector<128xf32> to vector<128x1xf32>
    %c0_15 = arith.constant 0 : index
    %c0_16 = arith.constant 0 : index
    %20 = vector.load %arg7[%c0_15, %c0_16] : memref<1x1xf32, #tpu.memory_space<vmem>>, vector<1x1xf32>
    %21 = vector.broadcast %20 : vector<1x1xf32> to vector<128x1xf32>
    %22 = arith.addf %19, %21 : vector<128x1xf32>
    %c0_17 = arith.constant 0 : index
    %c0_18 = arith.constant 0 : index
    %23 = vector.load %arg8[%c0_17, %c0_18] : memref<128x1xf32, #tpu.memory_space<vmem>>, vector<128x1xf32>
    tpu.vector_store %arg8[%c0_17, %c0_18], %22 {strides = array<i32>} : memref<128x1xf32, #tpu.memory_space<vmem>>, vector<128x1xf32>,
    return
  }
  func.func @transform_0(%arg0: i32) -> (i32, i32) {
    %c0_i32 = arith.constant 0 : i32
    %c0_i32_0 = arith.constant 0 : i32
    return %arg0, %c0_i32 : i32, i32
  }
  func.func @transform_1(%arg0: i32) -> (i32, i32) {
    %c0_i32 = arith.constant 0 : i32
    %c0_i32_0 = arith.constant 0 : i32
    %c0_i32_1 = arith.constant 0 : i32
    return %c0_i32, %c0_i32_0 : i32, i32
  }
  func.func @transform_2(%arg0: i32) -> (i32, i32) {
    %c0_i32 = arith.constant 0 : i32
    %c0_i32_0 = arith.constant 0 : i32
    %c0_i32_1 = arith.constant 0 : i32
    return %c0_i32, %c0_i32_0 : i32, i32
  }
  func.func @transform_3(%arg0: i32) -> (i32, i32) {
    %c0_i32 = arith.constant 0 : i32
    %c0_i32_0 = arith.constant 0 : i32
    %c0_i32_1 = arith.constant 0 : i32
    return %c0_i32, %c0_i32_0 : i32, i32
  }
  func.func @transform_4(%arg0: i32) -> (i32, i32) {
    %c0_i32 = arith.constant 0 : i32
    %c0_i32_0 = arith.constant 0 : i32
    %c0_i32_1 = arith.constant 0 : i32
    return %c0_i32, %c0_i32_0 : i32, i32
  }
  func.func @transform_5(%arg0: i32) -> (i32, i32) {
    %c0_i32 = arith.constant 0 : i32
    %c0_i32_0 = arith.constant 0 : i32
    %c0_i32_1 = arith.constant 0 : i32
    return %c0_i32, %c0_i32_0 : i32, i32
  }
  func.func @transform_6(%arg0: i32) -> (i32, i32) {
    %c0_i32 = arith.constant 0 : i32
    %c0_i32_0 = arith.constant 0 : i32
    %c0_i32_1 = arith.constant 0 : i32
    return %c0_i32, %c0_i32_0 : i32, i32
  }
  func.func @transform_7(%arg0: i32) -> (i32, i32) {
    %c0_i32 = arith.constant 0 : i32
    %c0_i32_0 = arith.constant 0 : i32
    return %arg0, %c0_i32 : i32, i32
  }
}

</mosaic_0001>

<llo_original>
// kernel: tpu_custom_call.1
$region0: #{tpu_custom_call.1}
  #allocation0 [shape = 'u32[]', space=smem, size = 0x4, offset = 0x4, fixed_abs, tag = 'smem constant byte address 0x4 - core index']
  #allocation1 [shape = 'u32[144,128]{1,0:T(1,128)}', space=vmem, size = 0x12000, scoped, tag = 'internal scratch']
  #allocation2 [shape = 'f32[1,1]{1,0:T(1,128)S(1)}', space=vmem, size = 0x200, scoped, tag = 'scoped memory for tpu_custom_call.1']
  %s0 = inlined_call_operand.vmem [shape: f32[256,24], index: 0, kind: input, shape index: {}]
  %s1 = inlined_call_operand.vmem [shape: f32[24,32], index: 1, kind: input, shape index: {}]
  %s2 = inlined_call_operand.vmem [shape: f32[1,32], index: 2, kind: input, shape index: {}]
  %s3 = inlined_call_operand.vmem [shape: f32[32,32], index: 3, kind: input, shape index: {}]
  %s4 = inlined_call_operand.vmem [shape: f32[1,32], index: 4, kind: input, shape index: {}]
  %s5 = inlined_call_operand.vmem [shape: f32[1,32], index: 5, kind: input, shape index: {}]
  %s6 = inlined_call_operand.<no memory space> [shape: f32[1,1], index: 6, kind: input, shape index: {}]
  %s7 = inlined_call_operand.vmem [shape: f32[256,1], index: 7, kind: output, shape index: {}]
  %s8 = sld [smem:[#allocation0]]
  $region61: #{tpu_custom_call.1} parent=0
    _
  %s10 = ssub.s32 1, %s8
  %s11 = scalar_select 0, %s10, %s8
  %v12 = vstv %s6
  %13 = vst [vmem:[#allocation2] sm:$0x1] %v12
  loop: start=0, step=1, limit=4
  $region2: #{tpu_custom_call.1} parent=0 // loop_pre_header
    _
  $region3: #{tpu_custom_call.1} parent=0 // loop_header
    %s15 = sphi 0, %s19
    %p16 = scmp.ge.s32.totalorder %s15, 4
    %s25 = sphi 0, %s27
    %s28 = sphi 0, %s25
    %s29 = sphi 0, %s28
    %s45 = sphi 0, %s29
    %s49 = sphi 0, %s49
    %s51 = sphi 0, %s49
    %s52 = sphi 0, %s51
    %s66 = sphi 0, %s52
    %s70 = sphi 0, %s70
    %s72 = sphi 0, %s70
    %s73 = sphi 0, %s72
    %s87 = sphi 0, %s73
    %s91 = sphi 0, %s91
    %s93 = sphi 0, %s91
    %s94 = sphi 0, %s93
    %s108 = sphi 0, %s94
    %s112 = sphi 0, %s112
    %s114 = sphi 0, %s112
    %s115 = sphi 0, %s114
    %s129 = sphi 0, %s115
    %s133 = sphi 0, %s133
    %s135 = sphi 0, %s133
    %s136 = sphi 0, %s135
    %s150 = sphi 0, %s136
    %s154 = sphi 0, %s154
    %s156 = sphi 0, %s154
    %s157 = sphi 0, %s156
    %s171 = sphi 0, %s157
    %s177 = sphi 0, %s179
    %s180 = sphi 0, %s177
    %s181 = sphi 0, %s180
    %s197 = sphi 0, %s181
  $region4: #{tpu_custom_call.1} parent=0 // loop_header_branch
    %18 = sbr.rel (%p16) target = $region8
  $region5: #{tpu_custom_call.1} parent=0 // loop_body
    %s20 = ssub.s32 %s15, 1
    %s21 = ssub.s32 %s15, 2
    %s22 = sadd.s32 %s15, 1
    %s23 = ssub.s32 %s15, %s22
    %p24 = scmp.eq.s32.totalorder %s23, 0
    %s26 = sadd.s32 %s25, 1
    %s27 = scalar_select %p24, %s25, %s26
    %p30 = pneg %p24
    %p31 = scmp.eq.s32.totalorder %s15, 1
    %p32 = por %p30, %p31
    %p33 = scmp.ne.s32.totalorder %s25, %s28
    %p34 = scmp.eq.s32.totalorder %s15, 0
    %p35 = por %p33, %p34
    %p36 = scmp.ne.s32.totalorder %s25, %s28
    %p37 = scmp.eq.s32.totalorder %s20, 1
    %p38 = por %p36, %p37
    %p39 = scmp.ne.s32.totalorder %s28, %s29
    %p40 = scmp.eq.s32.totalorder %s20, 0
    %p41 = por %p39, %p40
    %p42 = scmp.ne.s32.totalorder %s28, %s29
    %p43 = scmp.eq.s32.totalorder %s21, 1
    %p44 = por %p42, %p43
    %p46 = scmp.ne.s32.totalorder %s29, %s45
    %p47 = scmp.eq.s32.totalorder %s21, 0
    %p48 = por %p46, %p47
    %s50 = sadd.s32 %s49, 1
    %p53 = scmp.eq.s32.totalorder %s15, 1
    %p54 = scmp.ne.s32.totalorder %s49, %s51
    %p55 = scmp.eq.s32.totalorder %s15, 0
    %p56 = por %p54, %p55
    %p57 = scmp.ne.s32.totalorder %s49, %s51
    %p58 = scmp.eq.s32.totalorder %s20, 1
    %p59 = por %p57, %p58
    %p60 = scmp.ne.s32.totalorder %s51, %s52
    %p61 = scmp.eq.s32.totalorder %s20, 0
    %p62 = por %p60, %p61
    %p63 = scmp.ne.s32.totalorder %s51, %s52
    %p64 = scmp.eq.s32.totalorder %s21, 1
    %p65 = por %p63, %p64
    %p67 = scmp.ne.s32.totalorder %s52, %s66
    %p68 = scmp.eq.s32.totalorder %s21, 0
    %p69 = por %p67, %p68
    %s71 = sadd.s32 %s70, 1
    %p74 = scmp.eq.s32.totalorder %s15, 1
    %p75 = scmp.ne.s32.totalorder %s70, %s72
    %p76 = scmp.eq.s32.totalorder %s15, 0
    %p77 = por %p75, %p76
    %p78 = scmp.ne.s32.totalorder %s70, %s72
    %p79 = scmp.eq.s32.totalorder %s20, 1
    %p80 = por %p78, %p79
    %p81 = scmp.ne.s32.totalorder %s72, %s73
    %p82 = scmp.eq.s32.totalorder %s20, 0
    %p83 = por %p81, %p82
    %p84 = scmp.ne.s32.totalorder %s72, %s73
    %p85 = scmp.eq.s32.totalorder %s21, 1
    %p86 = por %p84, %p85
    %p88 = scmp.ne.s32.totalorder %s73, %s87
    %p89 = scmp.eq.s32.totalorder %s21, 0
    %p90 = por %p88, %p89
    %s92 = sadd.s32 %s91, 1
    %p95 = scmp.eq.s32.totalorder %s15, 1
    %p96 = scmp.ne.s32.totalorder %s91, %s93
    %p97 = scmp.eq.s32.totalorder %s15, 0
    %p98 = por %p96, %p97
    %p99 = scmp.ne.s32.totalorder %s91, %s93
    %p100 = scmp.eq.s32.totalorder %s20, 1
    %p101 = por %p99, %p100
    %p102 = scmp.ne.s32.totalorder %s93, %s94
    %p103 = scmp.eq.s32.totalorder %s20, 0
    %p104 = por %p102, %p103
    %p105 = scmp.ne.s32.totalorder %s93, %s94
    %p106 = scmp.eq.s32.totalorder %s21, 1
    %p107 = por %p105, %p106
    %p109 = scmp.ne.s32.totalorder %s94, %s108
    %p110 = scmp.eq.s32.totalorder %s21, 0
    %p111 = por %p109, %p110
    %s113 = sadd.s32 %s112, 1
    %p116 = scmp.eq.s32.totalorder %s15, 1
    %p117 = scmp.ne.s32.totalorder %s112, %s114
    %p118 = scmp.eq.s32.totalorder %s15, 0
    %p119 = por %p117, %p118
    %p120 = scmp.ne.s32.totalorder %s112, %s114
    %p121 = scmp.eq.s32.totalorder %s20, 1
    %p122 = por %p120, %p121
    %p123 = scmp.ne.s32.totalorder %s114, %s115
    %p124 = scmp.eq.s32.totalorder %s20, 0
    %p125 = por %p123, %p124
    %p126 = scmp.ne.s32.totalorder %s114, %s115
    %p127 = scmp.eq.s32.totalorder %s21, 1
    %p128 = por %p126, %p127
    %p130 = scmp.ne.s32.totalorder %s115, %s129
    %p131 = scmp.eq.s32.totalorder %s21, 0
    %p132 = por %p130, %p131
    %s134 = sadd.s32 %s133, 1
    %p137 = scmp.eq.s32.totalorder %s15, 1
    %p138 = scmp.ne.s32.totalorder %s133, %s135
    %p139 = scmp.eq.s32.totalorder %s15, 0
    %p140 = por %p138, %p139
    %p141 = scmp.ne.s32.totalorder %s133, %s135
    %p142 = scmp.eq.s32.totalorder %s20, 1
    %p143 = por %p141, %p142
    %p144 = scmp.ne.s32.totalorder %s135, %s136
    %p145 = scmp.eq.s32.totalorder %s20, 0
    %p146 = por %p144, %p145
    %p147 = scmp.ne.s32.totalorder %s135, %s136
    %p148 = scmp.eq.s32.totalorder %s21, 1
    %p149 = por %p147, %p148
    %p151 = scmp.ne.s32.totalorder %s136, %s150
    %p152 = scmp.eq.s32.totalorder %s21, 0
    %p153 = por %p151, %p152
    %s155 = sadd.s32 %s154, 1
    %p158 = scmp.eq.s32.totalorder %s15, 1
    %p159 = scmp.ne.s32.totalorder %s154, %s156
    %p160 = scmp.eq.s32.totalorder %s15, 0
    %p161 = por %p159, %p160
    %p162 = scmp.ne.s32.totalorder %s154, %s156
    %p163 = scmp.eq.s32.totalorder %s20, 1
    %p164 = por %p162, %p163
    %p165 = scmp.ne.s32.totalorder %s156, %s157
    %p166 = scmp.eq.s32.totalorder %s20, 0
    %p167 = por %p165, %p166
    %p168 = scmp.ne.s32.totalorder %s156, %s157
    %p169 = scmp.eq.s32.totalorder %s21, 1
    %p170 = por %p168, %p169
    %p172 = scmp.ne.s32.totalorder %s157, %s171
    %p173 = scmp.eq.s32.totalorder %s21, 0
    %p174 = por %p172, %p173
    %s175 = ssub.s32 %s15, %s22
    %p176 = scmp.eq.s32.totalorder %s175, 0
    %s178 = sadd.s32 %s177, 1
    %s179 = scalar_select %p176, %s177, %s178
    %p182 = pneg %p176
    %p183 = scmp.eq.s32.totalorder %s15, 1
    %p184 = por %p182, %p183
    %p185 = scmp.ne.s32.totalorder %s177, %s180
    %p186 = scmp.eq.s32.totalorder %s15, 0
    %p187 = por %p185, %p186
    %p188 = scmp.ne.s32.totalorder %s177, %s180
    %p189 = scmp.eq.s32.totalorder %s20, 1
    %p190 = por %p188, %p189
    %p191 = scmp.ne.s32.totalorder %s180, %s181
    %p192 = scmp.eq.s32.totalorder %s20, 0
    %p193 = por %p191, %p192
    %p194 = scmp.ne.s32.totalorder %s180, %s181
    %p195 = scmp.eq.s32.totalorder %s21, 1
    %p196 = por %p194, %p195
    %p198 = scmp.ne.s32.totalorder %s181, %s197
    %p199 = scmp.eq.s32.totalorder %s21, 0
    %p200 = por %p198, %p199
    %p201 = scmp.le.s32.totalorder 1, %s15
    %p202 = scmp.lt.s32.totalorder %s15, 3
    %p203 = pnand %p201, %p202
    %p204 = pneg %p203
    // Predicated region
    $region9: #{tpu_custom_call.1} parent=5 // pred_check
      _
    $region10: #{tpu_custom_call.1} parent=5 // pred_check_branch
      %206 = sbr.rel (%p203) target = $region12
    $region11: #{tpu_custom_call.1} parent=5 // pred_region
      %s207 = ssub.s32 %s15, 1
      // Predicated region
      $region13: #{tpu_custom_call.1} parent=11 // pred_check
        %p208 = pneg %p62
      $region14: #{tpu_custom_call.1} parent=11 // pred_check_branch
        %210 = sbr.rel (%p208) target = $region16
      $region15: #{tpu_custom_call.1} parent=11 // pred_region
        _
      $region16: #{tpu_custom_call.1} parent=11 // pred_fallthru
        _
      // Predicated region
      $region17: #{tpu_custom_call.1} parent=11 // pred_check
        %p211 = pneg %p83
      $region18: #{tpu_custom_call.1} parent=11 // pred_check_branch
        %213 = sbr.rel (%p211) target = $region20
      $region19: #{tpu_custom_call.1} parent=11 // pred_region
        _
      $region20: #{tpu_custom_call.1} parent=11 // pred_fallthru
        _
      // Predicated region
      $region21: #{tpu_custom_call.1} parent=11 // pred_check
        %p214 = pneg %p104
      $region22: #{tpu_custom_call.1} parent=11 // pred_check_branch
        %216 = sbr.rel (%p214) target = $region24
      $region23: #{tpu_custom_call.1} parent=11 // pred_region
        _
      $region24: #{tpu_custom_call.1} parent=11 // pred_fallthru
        _
      // Predicated region
      $region25: #{tpu_custom_call.1} parent=11 // pred_check
        %p217 = pneg %p125
      $region26: #{tpu_custom_call.1} parent=11 // pred_check_branch
        %219 = sbr.rel (%p217) target = $region28
      $region27: #{tpu_custom_call.1} parent=11 // pred_region
        _
      $region28: #{tpu_custom_call.1} parent=11 // pred_fallthru
        _
      // Predicated region
      $region29: #{tpu_custom_call.1} parent=11 // pred_check
        %p220 = pneg %p146
      $region30: #{tpu_custom_call.1} parent=11 // pred_check_branch
        %222 = sbr.rel (%p220) target = $region32
      $region31: #{tpu_custom_call.1} parent=11 // pred_region
        _
      $region32: #{tpu_custom_call.1} parent=11 // pred_fallthru
        _
      // Predicated region
      $region33: #{tpu_custom_call.1} parent=11 // pred_check
        %p223 = pneg %p167
      $region34: #{tpu_custom_call.1} parent=11 // pred_check_branch
        %225 = sbr.rel (%p223) target = $region36
      $region35: #{tpu_custom_call.1} parent=11 // pred_region
        _
      $region36: #{tpu_custom_call.1} parent=11 // pred_fallthru
        _
    $region12: #{tpu_custom_call.1} parent=5 // pred_fallthru
      _
    %p226 = scmp.lt.s32.totalorder %s15, 2
    // Predicated region
    $region37: #{tpu_custom_call.1} parent=5 // pred_check
      %p227 = pneg %p226
    $region38: #{tpu_custom_call.1} parent=5 // pred_check_branch
      %229 = sbr.rel (%p227) target = $region40
    $region39: #{tpu_custom_call.1} parent=5 // pred_region
      // Predicated region
      $region41: #{tpu_custom_call.1} parent=39 // pred_check
        %p230 = pneg %p35
      $region42: #{tpu_custom_call.1} parent=39 // pred_check_branch
        %232 = sbr.rel (%p230) target = $region44
      $region43: #{tpu_custom_call.1} parent=39 // pred_region
        %s233 = smul.u32 16, %s15
        %p234 = scmp.lt.s32.totalorder %s233, 31
        %s235 = scalar_select %p234, %s233, 31
        %s236 = smul.addr %s235, 8
        %s237 = scalar_lea.vmem %s0, %s236
        %s238 = smul.u32 16, %s15
      $region44: #{tpu_custom_call.1} parent=39 // pred_fallthru
        _
    $region40: #{tpu_custom_call.1} parent=5 // pred_fallthru
      _
    %p239 = scmp.le.s32.totalorder 1, %s15
    %p240 = scmp.lt.s32.totalorder %s15, 3
    %p241 = pnand %p239, %p240
    %p242 = pneg %p241
    // Predicated region
    $region45: #{tpu_custom_call.1} parent=5 // pred_check
      _
    $region46: #{tpu_custom_call.1} parent=5 // pred_check_branch
      %244 = sbr.rel (%p241) target = $region48
    $region47: #{tpu_custom_call.1} parent=5 // pred_region
      %s245 = ssub.s32 %s15, 1
      %s246 = smul.u32 16, %s20
      %p247 = scmp.lt.s32.totalorder %s246, 31
      %s248 = scalar_select %p247, %s246, 31
      %s249 = smul.addr %s248, 8
      %s250 = scalar_lea.vmem %s0, %s249
      %p251 = pneg %p41
      %p252 = pneg %p38
      %p253 = pneg %p62
      %p254 = pneg %p59
      %p255 = pneg %p83
      %p256 = pneg %p80
      %p257 = pneg %p104
      %p258 = pneg %p101
      %p259 = pneg %p125
      %p260 = pneg %p122
      %p261 = pneg %p146
      %p262 = pneg %p143
      %p263 = pneg %p167
      %p264 = pneg %p164
      %p265 = pneg %p193
      %p266 = pneg %p190
      %s267 = smul.u32 16, %s20
      %p268 = scmp.lt.s32.totalorder %s267, 31
      %s269 = scalar_select %p268, %s267, 31
      %s270 = smul.addr %s269, 8
      %s271 = scalar_lea.vmem %s7, %s270
      %s272 = smul.u32 16, %s20
      %p273 = scmp.lt.s32.totalorder %s272, 31
      %s274 = scalar_select %p273, %s272, 31
      %s275 = smul.addr %s274, 8
      %s276 = scalar_lea.vmem %s0, %s275
      %s277 = smul.u32 16, %s20
      %s278 = smul.u32 16, %s20
      %p279 = scmp.lt.s32.totalorder %s278, 31
      %s280 = scalar_select %p279, %s278, 31
      %s281 = smul.addr %s280, 8
      %s282 = scalar_lea.vmem %s7, %s281
      %s283 = smul.u32 16, %s20
      %v284 = vld [vmem:[%s276] sm:$0xff]
      %v285 = vld [vmem:[%s276 + $0x8] sm:$0xff]
      %v286 = vld [vmem:[%s276 + $0x10] sm:$0xff]
      %v287 = vld [vmem:[%s276 + $0x18] sm:$0xff]
      %v288 = vld [vmem:[%s276 + $0x20] sm:$0xff]
      %v289 = vld [vmem:[%s276 + $0x28] sm:$0xff]
      %v290 = vld [vmem:[%s276 + $0x30] sm:$0xff]
      %v291 = vld [vmem:[%s276 + $0x38] sm:$0xff]
      %v292 = vld [vmem:[%s276 + $0x40] sm:$0xff]
      %v293 = vld [vmem:[%s276 + $0x48] sm:$0xff]
      %v294 = vld [vmem:[%s276 + $0x50] sm:$0xff]
      %v295 = vld [vmem:[%s276 + $0x58] sm:$0xff]
      %v296 = vld [vmem:[%s276 + $0x60] sm:$0xff]
      %v297 = vld [vmem:[%s276 + $0x68] sm:$0xff]
      %v298 = vld [vmem:[%s276 + $0x70] sm:$0xff]
      %v299 = vld [vmem:[%s276 + $0x78] sm:$0xff]
      %v300 = vld [vmem:[%s1] sm:$0xff]
      %v301 = vld [vmem:[%s1 + $0x8] sm:$0xff]
      %v302 = vld [vmem:[%s1 + $0x10] sm:$0xff]
      %v303 = vld [vmem:[%s2] sm:$0x1]
      %v305 = vlaneseq
      %v306 = vshrl.u32 %v305, 7
      %v307 = vsub.s32 0, %v306
      %v308 = vrot.slane %v303, %v307
      %vm310 = vcmask 195584
      %v312 = vsel %vm310, %v284, 0
      %v315 = vsel %vm310, %v285, 0
      %v318 = vsel %vm310, %v286, 0
      %v321 = vsel %vm310, %v287, 0
      %v324 = vsel %vm310, %v288, 0
      %v327 = vsel %vm310, %v289, 0
      %v330 = vsel %vm310, %v290, 0
      %v333 = vsel %vm310, %v291, 0
      %v336 = vsel %vm310, %v292, 0
      %v339 = vsel %vm310, %v293, 0
      %v342 = vsel %vm310, %v294, 0
      %v345 = vsel %vm310, %v295, 0
      %v348 = vsel %vm310, %v296, 0
      %v351 = vsel %vm310, %v297, 0
      %v354 = vsel %vm310, %v298, 0
      %v357 = vsel %vm310, %v299, 0
      %359 = vmatprep.subr.mxu0 0.0
      %360 = vmatpush1.msra.mxu0 %v300
      %361 = vmatprep.subr.mxu0 0.0
      %362 = vmatpush1.msra.mxu0 %v301
      %363 = vmatprep.subr.mxu0 0.0
      %364 = vmatpush1.msra.mxu0 %v302
      %365 = vmatprep.subr.mxu0 0.0
      %366 = vmatpush1.msra.mxu0 0.0
      %367 = vmatprep.subr.mxu0 0.0
      %368 = vmatpush1.msra.mxu0 0.0
      %369 = vmatprep.subr.mxu0 0.0
      %370 = vmatpush1.msra.mxu0 0.0
      %371 = vmatprep.subr.mxu0 0.0
      %372 = vmatpush1.msra.mxu0 0.0
      %373 = vmatprep.subr.mxu0 0.0
      %374 = vmatpush1.msra.mxu0 0.0
      %375 = vmatprep.subr.mxu0 0.0
      %376 = vmatpush1.msra.mxu0 0.0
      %377 = vmatprep.subr.mxu0 0.0
      %378 = vmatpush1.msra.mxu0 0.0
      %379 = vmatprep.subr.mxu0 0.0
      %380 = vmatpush1.msra.mxu0 0.0
      %381 = vmatprep.subr.mxu0 0.0
      %382 = vmatpush1.msra.mxu0 0.0
      %383 = vmatprep.subr.mxu0 0.0
      %384 = vmatpush1.msra.mxu0 0.0
      %385 = vmatprep.subr.mxu0 0.0
      %386 = vmatpush1.msra.mxu0 0.0
      %387 = vmatprep.subr.mxu0 0.0
      %388 = vmatpush1.msra.mxu0 0.0
      %389 = vmatprep.subr.mxu0 0.0
      %390 = vmatpush1.msra.mxu0 0.0
      %391 = vmatprep.subr.mxu0 0.0
      %392 = vmatpush1.msra.mxu0 0.0
      %393 = vmatprep.subr.mxu0 0.0
      %394 = vmatpush1.msra.mxu0 0.0
      %395 = vmatprep.subr.mxu0 0.0
      %396 = vmatpush1.msra.mxu0 0.0
      %397 = vmatprep.subr.mxu0 0.0
      %398 = vmatpush1.msra.mxu0 0.0
      %399 = vmatprep.subr.mxu0 0.0
      %400 = vmatpush1.msra.mxu0 0.0
      %401 = vmatprep.subr.mxu0 0.0
      %402 = vmatpush1.msra.mxu0 0.0
      %403 = vmatprep.subr.mxu0 0.0
      %404 = vmatpush1.msra.mxu0 0.0
      %405 = vmatprep.subr.mxu0 0.0
      %406 = vmatpush1.msra.mxu0 0.0
      %407 = vmatprep.subr.mxu0 0.0
      %408 = vmatpush1.msra.mxu0 0.0
      %409 = vmatprep.subr.mxu0 0.0
      %410 = vmatpush1.msra.mxu0 0.0
      %411 = vmatprep.subr.mxu0 0.0
      %412 = vmatpush1.msra.mxu0 0.0
      %413 = vmatprep.subr.mxu0 0.0
      %414 = vmatpush1.msra.mxu0 0.0
      %415 = vmatprep.subr.mxu0 0.0
      %416 = vmatpush1.msra.mxu0 0.0
      %417 = vmatprep.subr.mxu0 0.0
      %418 = vmatpush1.msra.mxu0 0.0
      %419 = vmatprep.subr.mxu0 0.0
      %420 = vmatpush1.msra.mxu0 0.0
      %421 = vmatprep.subr.mxu0 0.0
      %422 = vmatpush1.msra.mxu0 0.0
      %423 = vmatprep.mubr.f32.mxu0 0.0
      %424 = vmatmul.mubr.f32.gmra.mrb[0].mxu0 %v312
      %v425 = vpop.f32.mrb[0].mxu0
      %v426 = vadd.f32 %v308, %v425
      %v427 = vpop.f32.mrb[0].mxu0
      %428 = vmatprep.mubr.f32.mxu0 0.0
      %429 = vmatmul.mubr.f32.gmra.mrb[0].mxu0 %v315
      %v430 = vpop.f32.mrb[0].mxu0
      %v431 = vadd.f32 %v308, %v430
      %v432 = vpop.f32.mrb[0].mxu0
      %433 = vmatprep.mubr.f32.mxu0 0.0
      %434 = vmatmul.mubr.f32.gmra.mrb[0].mxu0 %v318
      %v435 = vpop.f32.mrb[0].mxu0
      %v436 = vadd.f32 %v308, %v435
      %v437 = vpop.f32.mrb[0].mxu0
      %438 = vmatprep.mubr.f32.mxu0 0.0
      %439 = vmatmul.mubr.f32.gmra.mrb[0].mxu0 %v321
      %v440 = vpop.f32.mrb[0].mxu0
      %v441 = vadd.f32 %v308, %v440
      %v442 = vpop.f32.mrb[0].mxu0
      %443 = vmatprep.mubr.f32.mxu0 0.0
      %444 = vmatmul.mubr.f32.gmra.mrb[0].mxu0 %v324
      %v445 = vpop.f32.mrb[0].mxu0
      %v446 = vadd.f32 %v308, %v445
      %v447 = vpop.f32.mrb[0].mxu0
      %448 = vmatprep.mubr.f32.mxu0 0.0
      %449 = vmatmul.mubr.f32.gmra.mrb[0].mxu0 %v327
      %v450 = vpop.f32.mrb[0].mxu0
      %v451 = vadd.f32 %v308, %v450
      %v452 = vpop.f32.mrb[0].mxu0
      %453 = vmatprep.mubr.f32.mxu0 0.0
      %454 = vmatmul.mubr.f32.gmra.mrb[0].mxu0 %v330
      %v455 = vpop.f32.mrb[0].mxu0
      %v456 = vadd.f32 %v308, %v455
      %v457 = vpop.f32.mrb[0].mxu0
      %458 = vmatprep.mubr.f32.mxu0 0.0
      %459 = vmatmul.mubr.f32.gmra.mrb[0].mxu0 %v333
      %v460 = vpop.f32.mrb[0].mxu0
      %v461 = vadd.f32 %v308, %v460
      %v462 = vpop.f32.mrb[0].mxu0
      %463 = vmatprep.mubr.f32.mxu0 0.0
      %464 = vmatmul.mubr.f32.gmra.mrb[0].mxu0 %v336
      %v465 = vpop.f32.mrb[0].mxu0
      %v466 = vadd.f32 %v308, %v465
      %v467 = vpop.f32.mrb[0].mxu0
      %468 = vmatprep.mubr.f32.mxu0 0.0
      %469 = vmatmul.mubr.f32.gmra.mrb[0].mxu0 %v339
      %v470 = vpop.f32.mrb[0].mxu0
      %v471 = vadd.f32 %v308, %v470
      %v472 = vpop.f32.mrb[0].mxu0
      %473 = vmatprep.mubr.f32.mxu0 0.0
      %474 = vmatmul.mubr.f32.gmra.mrb[0].mxu0 %v342
      %v475 = vpop.f32.mrb[0].mxu0
      %v476 = vadd.f32 %v308, %v475
      %v477 = vpop.f32.mrb[0].mxu0
      %478 = vmatprep.mubr.f32.mxu0 0.0
      %479 = vmatmul.mubr.f32.gmra.mrb[0].mxu0 %v345
      %v480 = vpop.f32.mrb[0].mxu0
      %v481 = vadd.f32 %v308, %v480
      %v482 = vpop.f32.mrb[0].mxu0
      %483 = vmatprep.mubr.f32.mxu0 0.0
      %484 = vmatmul.mubr.f32.gmra.mrb[0].mxu0 %v348
      %v485 = vpop.f32.mrb[0].mxu0
      %v486 = vadd.f32 %v308, %v485
      %v487 = vpop.f32.mrb[0].mxu0
      %488 = vmatprep.mubr.f32.mxu0 0.0
      %489 = vmatmul.mubr.f32.gmra.mrb[0].mxu0 %v351
      %v490 = vpop.f32.mrb[0].mxu0
      %v491 = vadd.f32 %v308, %v490
      %v492 = vpop.f32.mrb[0].mxu0
      %493 = vmatprep.mubr.f32.mxu0 0.0
      %494 = vmatmul.mubr.f32.gmra.mrb[0].mxu0 %v354
      %v495 = vpop.f32.mrb[0].mxu0
      %v496 = vadd.f32 %v308, %v495
      %v497 = vpop.f32.mrb[0].mxu0
      %498 = vmatprep.mubr.f32.mxu0 0.0
      %499 = vmatmul.mubr.f32.gmra.mrb[0].mxu0 %v357
      %v500 = vpop.f32.mrb[0].mxu0
      %v501 = vadd.f32 %v308, %v500
      %v502 = vpop.f32.mrb[0].mxu0
      %503 = vdwg.mxu0
      %v504 = vmax.f32 %v426, 0.0
      %v505 = vmax.f32 %v431, 0.0
      %v506 = vmax.f32 %v436, 0.0
      %v507 = vmax.f32 %v441, 0.0
      %v508 = vmax.f32 %v446, 0.0
      %v509 = vmax.f32 %v451, 0.0
      %v510 = vmax.f32 %v456, 0.0
      %v511 = vmax.f32 %v461, 0.0
      %v512 = vmax.f32 %v466, 0.0
      %v513 = vmax.f32 %v471, 0.0
      %v514 = vmax.f32 %v476, 0.0
      %v515 = vmax.f32 %v481, 0.0
      %v516 = vmax.f32 %v486, 0.0
      %v517 = vmax.f32 %v491, 0.0
      %v518 = vmax.f32 %v496, 0.0
      %v519 = vmax.f32 %v501, 0.0
      %v520 = vld [vmem:[%s3] sm:$0xff]
      %v521 = vld [vmem:[%s3 + $0x8] sm:$0xff]
      %v522 = vld [vmem:[%s3 + $0x10] sm:$0xff]
      %v523 = vld [vmem:[%s3 + $0x18] sm:$0xff]
      %v524 = vld [vmem:[%s4] sm:$0x1]
      %v526 = vlaneseq
      %v527 = vshrl.u32 %v526, 7
      %v528 = vsub.s32 0, %v527
      %v529 = vrot.slane %v524, %v528
      %vm531 = vcmask 261120
      %v533 = vsel %vm531, %v504, 0
      %v536 = vsel %vm531, %v505, 0
      %v539 = vsel %vm531, %v506, 0
      %v542 = vsel %vm531, %v507, 0
      %v545 = vsel %vm531, %v508, 0
      %v548 = vsel %vm531, %v509, 0
      %v551 = vsel %vm531, %v510, 0
      %v554 = vsel %vm531, %v511, 0
      %v557 = vsel %vm531, %v512, 0
      %v560 = vsel %vm531, %v513, 0
      %v563 = vsel %vm531, %v514, 0
      %v566 = vsel %vm531, %v515, 0
      %v569 = vsel %vm531, %v516, 0
      %v572 = vsel %vm531, %v517, 0
      %v575 = vsel %vm531, %v518, 0
      %v578 = vsel %vm531, %v519, 0
      %580 = vmatprep.subr.mxu0 0.0
      %581 = vmatpush1.msra.mxu0 %v520
      %582 = vmatprep.subr.mxu0 0.0
      %583 = vmatpush1.msra.mxu0 %v521
      %584 = vmatprep.subr.mxu0 0.0
      %585 = vmatpush1.msra.mxu0 %v522
      %586 = vmatprep.subr.mxu0 0.0
      %587 = vmatpush1.msra.mxu0 %v523
      %588 = vmatprep.subr.mxu0 0.0
      %589 = vmatpush1.msra.mxu0 0.0
      %590 = vmatprep.subr.mxu0 0.0
      %591 = vmatpush1.msra.mxu0 0.0
      %592 = vmatprep.subr.mxu0 0.0
      %593 = vmatpush1.msra.mxu0 0.0
      %594 = vmatprep.subr.mxu0 0.0
      %595 = vmatpush1.msra.mxu0 0.0
      %596 = vmatprep.subr.mxu0 0.0
      %597 = vmatpush1.msra.mxu0 0.0
      %598 = vmatprep.subr.mxu0 0.0
      %599 = vmatpush1.msra.mxu0 0.0
      %600 = vmatprep.subr.mxu0 0.0
      %601 = vmatpush1.msra.mxu0 0.0
      %602 = vmatprep.subr.mxu0 0.0
      %603 = vmatpush1.msra.mxu0 0.0
      %604 = vmatprep.subr.mxu0 0.0
      %605 = vmatpush1.msra.mxu0 0.0
      %606 = vmatprep.subr.mxu0 0.0
      %607 = vmatpush1.msra.mxu0 0.0
      %608 = vmatprep.subr.mxu0 0.0
      %609 = vmatpush1.msra.mxu0 0.0
      %610 = vmatprep.subr.mxu0 0.0
      %611 = vmatpush1.msra.mxu0 0.0
      %612 = vmatprep.subr.mxu0 0.0
      %613 = vmatpush1.msra.mxu0 0.0
      %614 = vmatprep.subr.mxu0 0.0
      %615 = vmatpush1.msra.mxu0 0.0
      %616 = vmatprep.subr.mxu0 0.0
      %617 = vmatpush1.msra.mxu0 0.0
      %618 = vmatprep.subr.mxu0 0.0
      %619 = vmatpush1.msra.mxu0 0.0
      %620 = vmatprep.subr.mxu0 0.0
      %621 = vmatpush1.msra.mxu0 0.0
      %622 = vmatprep.subr.mxu0 0.0
      %623 = vmatpush1.msra.mxu0 0.0
      %624 = vmatprep.subr.mxu0 0.0
      %625 = vmatpush1.msra.mxu0 0.0
      %626 = vmatprep.subr.mxu0 0.0
      %627 = vmatpush1.msra.mxu0 0.0
      %628 = vmatprep.subr.mxu0 0.0
      %629 = vmatpush1.msra.mxu0 0.0
      %630 = vmatprep.subr.mxu0 0.0
      %631 = vmatpush1.msra.mxu0 0.0
      %632 = vmatprep.subr.mxu0 0.0
      %633 = vmatpush1.msra.mxu0 0.0
      %634 = vmatprep.subr.mxu0 0.0
      %635 = vmatpush1.msra.mxu0 0.0
      %636 = vmatprep.subr.mxu0 0.0
      %637 = vmatpush1.msra.mxu0 0.0
      %638 = vmatprep.subr.mxu0 0.0
      %639 = vmatpush1.msra.mxu0 0.0
      %640 = vmatprep.subr.mxu0 0.0
      %641 = vmatpush1.msra.mxu0 0.0
      %642 = vmatprep.subr.mxu0 0.0
      %643 = vmatpush1.msra.mxu0 0.0
      %644 = vmatprep.mubr.f32.mxu0 0.0
      %645 = vmatmul.mubr.f32.gmra.mrb[0].mxu0 %v533
      %v646 = vpop.f32.mrb[0].mxu0
      %v647 = vadd.f32 %v529, %v646
      %v648 = vpop.f32.mrb[0].mxu0
      %649 = vmatprep.mubr.f32.mxu0 0.0
      %650 = vmatmul.mubr.f32.gmra.mrb[0].mxu0 %v536
      %v651 = vpop.f32.mrb[0].mxu0
      %v652 = vadd.f32 %v529, %v651
      %v653 = vpop.f32.mrb[0].mxu0
      %654 = vmatprep.mubr.f32.mxu0 0.0
      %655 = vmatmul.mubr.f32.gmra.mrb[0].mxu0 %v539
      %v656 = vpop.f32.mrb[0].mxu0
      %v657 = vadd.f32 %v529, %v656
      %v658 = vpop.f32.mrb[0].mxu0
      %659 = vmatprep.mubr.f32.mxu0 0.0
      %660 = vmatmul.mubr.f32.gmra.mrb[0].mxu0 %v542
      %v661 = vpop.f32.mrb[0].mxu0
      %v662 = vadd.f32 %v529, %v661
      %v663 = vpop.f32.mrb[0].mxu0
      %664 = vmatprep.mubr.f32.mxu0 0.0
      %665 = vmatmul.mubr.f32.gmra.mrb[0].mxu0 %v545
      %v666 = vpop.f32.mrb[0].mxu0
      %v667 = vadd.f32 %v529, %v666
      %v668 = vpop.f32.mrb[0].mxu0
      %669 = vmatprep.mubr.f32.mxu0 0.0
      %670 = vmatmul.mubr.f32.gmra.mrb[0].mxu0 %v548
      %v671 = vpop.f32.mrb[0].mxu0
      %v672 = vadd.f32 %v529, %v671
      %v673 = vpop.f32.mrb[0].mxu0
      %674 = vmatprep.mubr.f32.mxu0 0.0
      %675 = vmatmul.mubr.f32.gmra.mrb[0].mxu0 %v551
      %v676 = vpop.f32.mrb[0].mxu0
      %v677 = vadd.f32 %v529, %v676
      %v678 = vpop.f32.mrb[0].mxu0
      %679 = vmatprep.mubr.f32.mxu0 0.0
      %680 = vmatmul.mubr.f32.gmra.mrb[0].mxu0 %v554
      %v681 = vpop.f32.mrb[0].mxu0
      %v682 = vadd.f32 %v529, %v681
      %v683 = vpop.f32.mrb[0].mxu0
      %684 = vmatprep.mubr.f32.mxu0 0.0
      %685 = vmatmul.mubr.f32.gmra.mrb[0].mxu0 %v557
      %v686 = vpop.f32.mrb[0].mxu0
      %v687 = vadd.f32 %v529, %v686
      %v688 = vpop.f32.mrb[0].mxu0
      %689 = vmatprep.mubr.f32.mxu0 0.0
      %690 = vmatmul.mubr.f32.gmra.mrb[0].mxu0 %v560
      %v691 = vpop.f32.mrb[0].mxu0
      %v692 = vadd.f32 %v529, %v691
      %v693 = vpop.f32.mrb[0].mxu0
      %694 = vmatprep.mubr.f32.mxu0 0.0
      %695 = vmatmul.mubr.f32.gmra.mrb[0].mxu0 %v563
      %v696 = vpop.f32.mrb[0].mxu0
      %v697 = vadd.f32 %v529, %v696
      %v698 = vpop.f32.mrb[0].mxu0
      %699 = vmatprep.mubr.f32.mxu0 0.0
      %700 = vmatmul.mubr.f32.gmra.mrb[0].mxu0 %v566
      %v701 = vpop.f32.mrb[0].mxu0
      %v702 = vadd.f32 %v529, %v701
      %v703 = vpop.f32.mrb[0].mxu0
      %704 = vmatprep.mubr.f32.mxu0 0.0
      %705 = vmatmul.mubr.f32.gmra.mrb[0].mxu0 %v569
      %v706 = vpop.f32.mrb[0].mxu0
      %v707 = vadd.f32 %v529, %v706
      %v708 = vpop.f32.mrb[0].mxu0
      %709 = vmatprep.mubr.f32.mxu0 0.0
      %710 = vmatmul.mubr.f32.gmra.mrb[0].mxu0 %v572
      %v711 = vpop.f32.mrb[0].mxu0
      %v712 = vadd.f32 %v529, %v711
      %v713 = vpop.f32.mrb[0].mxu0
      %714 = vmatprep.mubr.f32.mxu0 0.0
      %715 = vmatmul.mubr.f32.gmra.mrb[0].mxu0 %v575
      %v716 = vpop.f32.mrb[0].mxu0
      %v717 = vadd.f32 %v529, %v716
      %v718 = vpop.f32.mrb[0].mxu0
      %719 = vmatprep.mubr.f32.mxu0 0.0
      %720 = vmatmul.mubr.f32.gmra.mrb[0].mxu0 %v578
      %v721 = vpop.f32.mrb[0].mxu0
      %v722 = vadd.f32 %v529, %v721
      %v723 = vpop.f32.mrb[0].mxu0
      %724 = vdwg.mxu0
      %v725 = vmax.f32 %v647, 0.0
      %v726 = vmax.f32 %v652, 0.0
      %v727 = vmax.f32 %v657, 0.0
      %v728 = vmax.f32 %v662, 0.0
      %v729 = vmax.f32 %v667, 0.0
      %v730 = vmax.f32 %v672, 0.0
      %v731 = vmax.f32 %v677, 0.0
      %v732 = vmax.f32 %v682, 0.0
      %v733 = vmax.f32 %v687, 0.0
      %v734 = vmax.f32 %v692, 0.0
      %v735 = vmax.f32 %v697, 0.0
      %v736 = vmax.f32 %v702, 0.0
      %v737 = vmax.f32 %v707, 0.0
      %v738 = vmax.f32 %v712, 0.0
      %v739 = vmax.f32 %v717, 0.0
      %v740 = vmax.f32 %v722, 0.0
      %v741 = vld [vmem:[%s5] sm:$0x1]
      %v743 = vlaneseq
      %v744 = vshrl.u32 %v743, 7
      %v745 = vsub.s32 0, %v744
      %v746 = vrot.slane %v741, %v745
      %v748 = vmul.f32 %v725, %v746
      %v749 = vmul.f32 %v726, %v746
      %v750 = vmul.f32 %v727, %v746
      %v751 = vmul.f32 %v728, %v746
      %v752 = vmul.f32 %v729, %v746
      %v753 = vmul.f32 %v730, %v746
      %v754 = vmul.f32 %v731, %v746
      %v755 = vmul.f32 %v732, %v746
      %v756 = vmul.f32 %v733, %v746
      %v757 = vmul.f32 %v734, %v746
      %v758 = vmul.f32 %v735, %v746
      %v759 = vmul.f32 %v736, %v746
      %v760 = vmul.f32 %v737, %v746
      %v761 = vmul.f32 %v738, %v746
      %v762 = vmul.f32 %v739, %v746
      %v763 = vmul.f32 %v740, %v746
      %v764 = vsel %vm531, %v748, 0.0
      %765 = vadd.xlane.f32.xlu0 %v764
      %v766 = vpop.xlane.xlu0 %765
      %v767 = vsel %vm531, %v749, 0.0
      %768 = vadd.xlane.f32.xlu0 %v767
      %v769 = vpop.xlane.xlu0 %768
      %v770 = vsel %vm531, %v750, 0.0
      %771 = vadd.xlane.f32.xlu0 %v770
      %v772 = vpop.xlane.xlu0 %771
      %v773 = vsel %vm531, %v751, 0.0
      %774 = vadd.xlane.f32.xlu0 %v773
      %v775 = vpop.xlane.xlu0 %774
      %v776 = vsel %vm531, %v752, 0.0
      %777 = vadd.xlane.f32.xlu0 %v776
      %v778 = vpop.xlane.xlu0 %777
      %v779 = vsel %vm531, %v753, 0.0
      %780 = vadd.xlane.f32.xlu0 %v779
      %v781 = vpop.xlane.xlu0 %780
      %v782 = vsel %vm531, %v754, 0.0
      %783 = vadd.xlane.f32.xlu0 %v782
      %v784 = vpop.xlane.xlu0 %783
      %v785 = vsel %vm531, %v755, 0.0
      %786 = vadd.xlane.f32.xlu0 %v785
      %v787 = vpop.xlane.xlu0 %786
      %v788 = vsel %vm531, %v756, 0.0
      %789 = vadd.xlane.f32.xlu0 %v788
      %v790 = vpop.xlane.xlu0 %789
      %v791 = vsel %vm531, %v757, 0.0
      %792 = vadd.xlane.f32.xlu0 %v791
      %v793 = vpop.xlane.xlu0 %792
      %v794 = vsel %vm531, %v758, 0.0
      %795 = vadd.xlane.f32.xlu0 %v794
      %v796 = vpop.xlane.xlu0 %795
      %v797 = vsel %vm531, %v759, 0.0
      %798 = vadd.xlane.f32.xlu0 %v797
      %v799 = vpop.xlane.xlu0 %798
      %v800 = vsel %vm531, %v760, 0.0
      %801 = vadd.xlane.f32.xlu0 %v800
      %v802 = vpop.xlane.xlu0 %801
      %v803 = vsel %vm531, %v761, 0.0
      %804 = vadd.xlane.f32.xlu0 %v803
      %v805 = vpop.xlane.xlu0 %804
      %v806 = vsel %vm531, %v762, 0.0
      %807 = vadd.xlane.f32.xlu0 %v806
      %v808 = vpop.xlane.xlu0 %807
      %v809 = vsel %vm531, %v763, 0.0
      %810 = vadd.xlane.f32.xlu0 %v809
      %v811 = vpop.xlane.xlu0 %810
      %v812 = vld [vmem:[#allocation2] sm:$0x1]
      %v814 = vlaneseq
      %v815 = vshrl.u32 %v814, 7
      %v816 = vsub.s32 0, %v815
      %v817 = vrot.slane %v812, %v816
      %v819 = vadd.f32 %v766, %v817
      %v820 = vadd.f32 %v769, %v817
      %v821 = vadd.f32 %v772, %v817
      %v822 = vadd.f32 %v775, %v817
      %v823 = vadd.f32 %v778, %v817
      %v824 = vadd.f32 %v781, %v817
      %v825 = vadd.f32 %v784, %v817
      %v826 = vadd.f32 %v787, %v817
      %v827 = vadd.f32 %v790, %v817
      %v828 = vadd.f32 %v793, %v817
      %v829 = vadd.f32 %v796, %v817
      %v830 = vadd.f32 %v799, %v817
      %v831 = vadd.f32 %v802, %v817
      %v832 = vadd.f32 %v805, %v817
      %v833 = vadd.f32 %v808, %v817
      %v834 = vadd.f32 %v811, %v817
      %vm835 = vcmask 7168
      %836 = vst.msk [vmem:[%s282] sm:$0xff] %vm835, %v819
      %837 = vst.msk [vmem:[%s282 + $0x8] sm:$0xff] %vm835, %v820
      %838 = vst.msk [vmem:[%s282 + $0x10] sm:$0xff] %vm835, %v821
      %839 = vst.msk [vmem:[%s282 + $0x18] sm:$0xff] %vm835, %v822
      %840 = vst.msk [vmem:[%s282 + $0x20] sm:$0xff] %vm835, %v823
      %841 = vst.msk [vmem:[%s282 + $0x28] sm:$0xff] %vm835, %v824
      %842 = vst.msk [vmem:[%s282 + $0x30] sm:$0xff] %vm835, %v825
      %843 = vst.msk [vmem:[%s282 + $0x38] sm:$0xff] %vm835, %v826
      %844 = vst.msk [vmem:[%s282 + $0x40] sm:$0xff] %vm835, %v827
      %845 = vst.msk [vmem:[%s282 + $0x48] sm:$0xff] %vm835, %v828
      %846 = vst.msk [vmem:[%s282 + $0x50] sm:$0xff] %vm835, %v829
      %847 = vst.msk [vmem:[%s282 + $0x58] sm:$0xff] %vm835, %v830
      %848 = vst.msk [vmem:[%s282 + $0x60] sm:$0xff] %vm835, %v831
      %849 = vst.msk [vmem:[%s282 + $0x68] sm:$0xff] %vm835, %v832
      %850 = vst.msk [vmem:[%s282 + $0x70] sm:$0xff] %vm835, %v833
      %851 = vst.msk [vmem:[%s282 + $0x78] sm:$0xff] %vm835, %v834
      %s852 = smul.u32 16, %s20
      %p853 = scmp.lt.s32.totalorder %s852, 31
      %s854 = scalar_select %p853, %s852, 31
      %s855 = smul.addr %s854, 8
      %s856 = scalar_lea.vmem %s7, %s855
      // Predicated region
      $region49: #{tpu_custom_call.1} parent=47 // pred_check
        %p857 = pneg %p190
      $region50: #{tpu_custom_call.1} parent=47 // pred_check_branch
        %859 = sbr.rel (%p857) target = $region52
      $region51: #{tpu_custom_call.1} parent=47 // pred_region
        %s860 = smul.u32 16, %s20
      $region52: #{tpu_custom_call.1} parent=47 // pred_fallthru
        _
    $region48: #{tpu_custom_call.1} parent=5 // pred_fallthru
      _
    %p861 = scmp.le.s32.totalorder 2, %s15
    // Predicated region
    $region53: #{tpu_custom_call.1} parent=5 // pred_check
      %p862 = pneg %p861
    $region54: #{tpu_custom_call.1} parent=5 // pred_check_branch
      %864 = sbr.rel (%p862) target = $region56
    $region55: #{tpu_custom_call.1} parent=5 // pred_region
      %s865 = ssub.s32 %s15, 2
      // Predicated region
      $region57: #{tpu_custom_call.1} parent=55 // pred_check
        %p866 = pneg %p196
      $region58: #{tpu_custom_call.1} parent=55 // pred_check_branch
        %868 = sbr.rel (%p866) target = $region60
      $region59: #{tpu_custom_call.1} parent=55 // pred_region
        %s869 = smul.u32 16, %s21
        %p870 = scmp.lt.s32.totalorder %s869, 31
        %s871 = scalar_select %p870, %s869, 31
        %s872 = smul.addr %s871, 8
        %s873 = scalar_lea.vmem %s7, %s872
      $region60: #{tpu_custom_call.1} parent=55 // pred_fallthru
        _
    $region56: #{tpu_custom_call.1} parent=5 // pred_fallthru
      _
  $region6: #{tpu_custom_call.1} parent=0 // loop_footer
    %s19 = sadd.s32 1, %s15
  $region7: #{tpu_custom_call.1} parent=0 // loop_footer_branch
    %14 = sbr.rel target = $region3
  $region8: #{tpu_custom_call.1} parent=0 // loop_exit
    _

</llo_original>
